<compile_context>
chip_gen: v5e
topology: v5e:2x2
jax: 0.10.0
libtpu: 0.0.40
codegen_flags: <defaults>
</compile_context>

<pallas_src>
import jax
import jax.numpy as jnp
from jax.experimental import pallas as pl
from jax.experimental.pallas import tpu as pltpu


def _addcoords_kernel(x_ref, coords_ref, out_ref):
    """x_ref: (TB, C, hw); coords_ref: (2, hw); out_ref: (TB, C+2, hw)."""
    tb, c, hw = x_ref.shape
    # Pass-through channels: one lane-dense copy.
    out_ref[:, 0:c, :] = x_ref[...]
    # Both coordinate channels (yy, xx) in a single store, broadcast over TB.
    out_ref[:, c:c + 2, :] = jnp.broadcast_to(coords_ref[...], (tb, 2, hw))


def _largest_divisor_leq(n, cap):
    cap = int(max(1, min(n, cap)))
    for d in range(cap, 0, -1):
        if n % d == 0:
            return d
    return 1


def _pick_tiles(N, C, HW, itemsize, target_bytes):
    """Choose (batch-tile, HW-tile) so each grid step moves ~target_bytes."""
    row_bytes = (2 * C + 2) * itemsize            # in + out bytes per (batch, pixel)
    total_bytes = N * HW * row_bytes
    if total_bytes <= target_bytes:
        return N, HW                              # tiny, overhead-bound: one step
    per_batch_bytes = HW * row_bytes
    if per_batch_bytes <= target_bytes:
        tb = _largest_divisor_leq(N, target_bytes // per_batch_bytes)
        return tb, HW                             # total > target => >= 2 steps
    # A single batch element is already large: tile HW in multiples of 128 lanes.
    if HW % 128 == 0:
        max_chunks = max(1, target_bytes // (128 * row_bytes))
        hw_tile = 128 * _largest_divisor_leq(HW // 128, max_chunks)
    else:
        hw_tile = HW   # rare non-128-multiple HW: keep the full row resident
    return 1, hw_tile


def add_coords(x, *, target_block_bytes=2 * 1024 * 1024):
    """x: (N, C, H, W) -> (N, C+2, H, W), channels [x..., yy, xx] in [-1, 1]."""
    N, C, H, W = x.shape
    HW = H * W
    itemsize = jnp.dtype(x.dtype).itemsize

    # Hoisted coordinate slab (2, HW): same op order as the PyTorch module
    # (divide, *2, -1) in f32, cast to the tensor dtype at the end.
    yy = (jnp.arange(H, dtype=jnp.float32) / jnp.float32(H - 1)) * 2.0 - 1.0
    xx = (jnp.arange(W, dtype=jnp.float32) / jnp.float32(W - 1)) * 2.0 - 1.0
    yy_row = jnp.broadcast_to(yy[:, None], (H, W)).reshape(1, HW)
    xx_row = jnp.broadcast_to(xx[None, :], (H, W)).reshape(1, HW)
    coords = jnp.concatenate([yy_row, xx_row], axis=0).astype(x.dtype)   # (2, HW)

    x_flat = x.reshape(N, C, HW)                   # contiguous; lane-dense last dim

    tb, hw_tile = _pick_tiles(N, C, HW, itemsize, target_block_bytes)
    grid = (N // tb, HW // hw_tile)

    out_flat = pl.pallas_call(
        _addcoords_kernel,
        out_shape=jax.ShapeDtypeStruct((N, C + 2, HW), x.dtype),
        grid_spec=pltpu.PrefetchScalarGridSpec(
            num_scalar_prefetch=0,
            grid=grid,
            in_specs=[
                pl.BlockSpec((tb, C, hw_tile), lambda b, h: (b, 0, h)),
                pl.BlockSpec((2, hw_tile), lambda b, h: (0, h)),
            ],
            out_specs=pl.BlockSpec((tb, C + 2, hw_tile), lambda b, h: (b, 0, h)),
        ),
        compiler_params=pltpu.CompilerParams(
            dimension_semantics=("parallel", "parallel")),
    )(x_flat, coords)

    return out_flat.reshape(N, C + 2, H, W)


def add_coords_ref(x):
    """Pure-JAX reference mirroring the PyTorch module exactly."""
    N, C, H, W = x.shape
    yy = (jnp.arange(H, dtype=jnp.float32) / jnp.float32(H - 1)) * 2.0 - 1.0
    xx = (jnp.arange(W, dtype=jnp.float32) / jnp.float32(W - 1)) * 2.0 - 1.0
    yy_ch = jnp.broadcast_to(yy[None, None, :, None], (N, 1, H, W)).astype(x.dtype)
    xx_ch = jnp.broadcast_to(xx[None, None, None, :], (N, 1, H, W)).astype(x.dtype)
    return jnp.concatenate([x, yy_ch, xx_ch], axis=1)


if __name__ == "__main__":
    N, C, H, W = 2, 4, 16, 16
    key = jax.random.PRNGKey(0)
    x = jax.random.normal(key, (N, C, H, W), jnp.float32)

    out = jax.block_until_ready(add_coords(x))

    assert out.shape == (N, C + 2, H, W)
    assert bool(jnp.all(jnp.isfinite(out)))
    ref = add_coords_ref(x)
    assert bool(jnp.allclose(out, ref, atol=1e-6, rtol=1e-6))

    print("KERNEL_OK")
</pallas_src>

<mosaic_0001>
module attributes {stable_mosaic.version = 11 : i64} {
  func.func @_addcoords_kernel(%arg0: i32, %arg1: i32, %arg2: memref<2x4x256xf32, #tpu.memory_space<vmem>>, %arg3: memref<2x256xf32, #tpu.memory_space<vmem>>, %arg4: memref<2x6x256xf32, #tpu.memory_space<vmem>>) attributes {dimension_semantics = [#tpu.dimension_semantics<parallel>, #tpu.dimension_semantics<parallel>], iteration_bounds = array<i64: 1, 1>, scalar_prefetch = 0 : i64, scratch_operands = 0 : i64, tpu.core_type = #tpu.core_type<tc>, window_params = [{transform_indices = @transform_0, window_bounds = array<i64: 2, 4, 256>}, {transform_indices = @transform_1, window_bounds = array<i64: 2, 256>}, {transform_indices = @transform_2, window_bounds = array<i64: 2, 6, 256>}]} {
    %c0 = arith.constant 0 : index
    %c0_0 = arith.constant 0 : index
    %c0_1 = arith.constant 0 : index
    %0 = vector.load %arg2[%c0, %c0_0, %c0_1] : memref<2x4x256xf32, #tpu.memory_space<vmem>>, vector<2x4x256xf32>
    %c0_2 = arith.constant 0 : index
    %c0_3 = arith.constant 0 : index
    %c0_4 = arith.constant 0 : index
    %1 = vector.load %arg4[%c0_2, %c0_3, %c0_4] : memref<2x6x256xf32, #tpu.memory_space<vmem>>, vector<2x4x256xf32>
    tpu.vector_store %arg4[%c0_2, %c0_3, %c0_4], %0 {strides = array<i32>} : memref<2x6x256xf32, #tpu.memory_space<vmem>>, vector<2x4x256xf32>,
    %c0_5 = arith.constant 0 : index
    %c0_6 = arith.constant 0 : index
    %2 = vector.load %arg3[%c0_5, %c0_6] : memref<2x256xf32, #tpu.memory_space<vmem>>, vector<2x256xf32>
    %3 = vector.shape_cast %2 : vector<2x256xf32> to vector<1x2x256xf32>
    %4 = vector.broadcast %3 : vector<1x2x256xf32> to vector<2x2x256xf32>
    %c0_7 = arith.constant 0 : index
    %c4 = arith.constant 4 : index
    %c0_8 = arith.constant 0 : index
    %5 = vector.load %arg4[%c0_7, %c4, %c0_8] : memref<2x6x256xf32, #tpu.memory_space<vmem>>, vector<2x2x256xf32>
    tpu.vector_store %arg4[%c0_7, %c4, %c0_8], %4 {strides = array<i32>} : memref<2x6x256xf32, #tpu.memory_space<vmem>>, vector<2x2x256xf32>,
    return
  }
  func.func @transform_0(%arg0: i32, %arg1: i32) -> (i32, i32, i32) {
    %c0_i32 = arith.constant 0 : i32
    %c0_i32_0 = arith.constant 0 : i32
    return %arg0, %c0_i32, %arg1 : i32, i32, i32
  }
  func.func @transform_1(%arg0: i32, %arg1: i32) -> (i32, i32) {
    %c0_i32 = arith.constant 0 : i32
    %c0_i32_0 = arith.constant 0 : i32
    return %c0_i32, %arg1 : i32, i32
  }
  func.func @transform_2(%arg0: i32, %arg1: i32) -> (i32, i32, i32) {
    %c0_i32 = arith.constant 0 : i32
    %c0_i32_0 = arith.constant 0 : i32
    return %arg0, %c0_i32, %arg1 : i32, i32, i32
  }
}

</mosaic_0001>

<llo_original>
// kernel: tpu_custom_call.1
$region0: #{tpu_custom_call.1}
  #allocation0 [shape = 'u32[]', space=smem, size = 0x4, offset = 0x4, fixed_abs, tag = 'smem constant byte address 0x4 - core index']
  #allocation1 [shape = 'u32[72,128]{1,0:T(1,128)}', space=vmem, size = 0x9000, scoped, tag = 'internal scratch']
  %s0 = inlined_call_operand.hbm [shape: f32[2,4,256], index: 0, kind: input, shape index: {}]
  %s1 = inlined_call_operand.hbm [shape: f32[2,256], index: 1, kind: input, shape index: {}]
  %s2 = inlined_call_operand.vmem [shape: f32[2,6,256], index: 2, kind: output, shape index: {}]
  %s3 = sld [smem:[#allocation0]]
  $region26: #{tpu_custom_call.1} parent=0
    _
  %s5 = ssub.s32 1, %s3
  %s6 = scalar_select 0, %s5, %s3
  $region1: #{tpu_custom_call.1} parent=0
    #allocation2 [shape = 'u8[8192]{0}', space=vmem, size = 0x2000, scoped, tag = 'input window, operand 0, single buffered']
    #allocation3 [shape = 's32[1]{0}', space=sflag, size = 0x4, scoped, tag = 'scoped memory for tpu_custom_call.1']
    #allocation4 [shape = 'u8[2048]{0}', space=vmem, size = 0x800, scoped, tag = 'input window, operand 1, single buffered']
    #allocation5 [shape = 's32[1]{0}', space=sflag, size = 0x4, scoped, tag = 'scoped memory for tpu_custom_call.1']
    %7 = vsyncpa [#allocation3], 0
    %8 = vsyncpa [#allocation5], 0
    // Predicated region
    $region2: #{tpu_custom_call.1} parent=1 // pred_check
      _
    $region3: #{tpu_custom_call.1} parent=1 // pred_check_branch
      %10 = sbr.rel (0) target = $region5
    $region4: #{tpu_custom_call.1} parent=1 // pred_region
      %12 = vsyncadd [#allocation3], 0
      %s13 = sshll.u32 %s0, 4
      %s14 = int_to_ptr.hbm [resolvable:$true] %s13
      %s15 = sshll.u32 [#allocation2], 4
      %s16 = int_to_ptr.vmem [resolvable:$true] %s15
      %21 = dma.hbm_to_vmem [thread:$0]  %s14, 256, %s16, [#allocation3], 128, 128, 8
    $region5: #{tpu_custom_call.1} parent=1 // pred_fallthru
      _
    // Predicated region
    $region6: #{tpu_custom_call.1} parent=1 // pred_check
      _
    $region7: #{tpu_custom_call.1} parent=1 // pred_check_branch
      %23 = sbr.rel (0) target = $region9
    $region8: #{tpu_custom_call.1} parent=1 // pred_region
      %25 = vsyncadd [#allocation5], 0
      %s27 = sshll.u32 %s1, 4
      %s28 = int_to_ptr.hbm [resolvable:$true] %s27
      %s29 = sshll.u32 [#allocation4], 4
      %s30 = int_to_ptr.vmem [resolvable:$true] %s29
      %32 = dma.hbm_to_vmem [thread:$0]  %s28, 64, %s30, [#allocation5]
    $region9: #{tpu_custom_call.1} parent=1 // pred_fallthru
      _
    // Predicated region
    $region10: #{tpu_custom_call.1} parent=1 // pred_check
      _
    $region11: #{tpu_custom_call.1} parent=1 // pred_check_branch
      %34 = sbr.rel (0) target = $region13
    $region12: #{tpu_custom_call.1} parent=1 // pred_region
      %36 = dma.done [#allocation3], 256
    $region13: #{tpu_custom_call.1} parent=1 // pred_fallthru
      _
    // Predicated region
    $region14: #{tpu_custom_call.1} parent=1 // pred_check
      _
    $region15: #{tpu_custom_call.1} parent=1 // pred_check_branch
      %38 = sbr.rel (0) target = $region17
    $region16: #{tpu_custom_call.1} parent=1 // pred_region
      %40 = dma.done [#allocation5], 64
    $region17: #{tpu_custom_call.1} parent=1 // pred_fallthru
      _
    %v41 = vld [vmem:[#allocation2] sm:$0xff]
    %v42 = vld [vmem:[#allocation2 + $0x8] sm:$0xff]
    %45 = vst [vmem:[#allocation1] ss:$2 sm:$0xff] %v41
    %v46 = vld.sshfl [vmem:[#allocation1] sm:$0xff pattern:$0x75316420]
    %v47 = vld.sshfl [vmem:[#allocation1 + $0x8] sm:$0xff pattern:$0x75316420]
    %s48 = scalar_lea.vmem [#allocation1], 16
    %49 = vst [vmem:[%s48] ss:$2 sm:$0xff] %v42
    %v50 = vld.sshfl [vmem:[#allocation1 + $0x10] sm:$0xff pattern:$0x75316420]
    %v51 = vld.sshfl [vmem:[#allocation1 + $0x18] sm:$0xff pattern:$0x75316420]
    %56 = vst [vmem:[%s2] sm:$0xf] %v46
    %57 = vst [vmem:[%s2 + $0x8] sm:$0xf] %v47
    %58 = vst [vmem:[%s2 + $0x10] sm:$0xf] %v50
    %59 = vst [vmem:[%s2 + $0x18] sm:$0xf] %v51
    %v60 = vld [vmem:[#allocation4] sm:$0xf]
    %s62 = scalar_lea.vmem [#allocation1], 2
    %63 = vst [vmem:[%s62] ss:$4 sm:$0xff] %v60
    %v64 = vld.sshfl [vmem:[#allocation1] sm:$0xff pattern:$0x73625140]
    %v65 = vld.sshfl [vmem:[#allocation1 + $0x8] sm:$0xff pattern:$0x73625140]
    %s66 = scalar_lea.vmem [#allocation1], 34
    %67 = vst [vmem:[%s66] ss:$4 sm:$0xff] %v60
    %v68 = vld.sshfl [vmem:[#allocation1 + $0x20] sm:$0xff pattern:$0x73625140]
    %v69 = vld.sshfl [vmem:[#allocation1 + $0x28] sm:$0xff pattern:$0x73625140]
    %74 = vst [vmem:[%s2] sm:$0x30] %v64
    %75 = vst [vmem:[%s2 + $0x8] sm:$0x30] %v65
    %76 = vst [vmem:[%s2 + $0x10] sm:$0x30] %v68
    %77 = vst [vmem:[%s2 + $0x18] sm:$0x30] %v69
    // Predicated region
    $region18: #{tpu_custom_call.1} parent=1 // pred_check
      _
    $region19: #{tpu_custom_call.1} parent=1 // pred_check_branch
      %79 = sbr.rel (0) target = $region21
    $region20: #{tpu_custom_call.1} parent=1 // pred_region
      _
    $region21: #{tpu_custom_call.1} parent=1 // pred_fallthru
      _
    // Predicated region
    $region22: #{tpu_custom_call.1} parent=1 // pred_check
      _
    $region23: #{tpu_custom_call.1} parent=1 // pred_check_branch
      %81 = sbr.rel (0) target = $region25
    $region24: #{tpu_custom_call.1} parent=1 // pred_region
      _
    $region25: #{tpu_custom_call.1} parent=1 // pred_fallthru
      _
    %82 = vsyncpa [#allocation3], 1
    %83 = vsyncpa [#allocation5], 1

</llo_original>
